<compile_context>
chip_gen: v6e
topology: v6e:2x2x1
jax: 0.10.0
libtpu: 0.0.40
codegen_flags: <defaults>
</compile_context>

<pallas_src>
import jax
import jax.numpy as jnp
from jax.experimental import pallas as pl
from jax.experimental.pallas import tpu as pltpu

# Board dimensions (tic-tac-toe style cross/zero board) and hidden size.
Y_LEN = 3
X_LEN = 3
N_HIDDEN = 30
_FEAT = Y_LEN * X_LEN


def _round_up(n, m):
    return ((n + m - 1) // m) * m


def _mlp_kernel(x_ref, w1_ref, b1_ref, w2_ref, b2_ref, o_ref):
    # Two MXU matmuls (bf16 in, f32 accumulate) + f32 VPU/EUP epilogue.
    x = x_ref[...]                                                 # (TB, feat) bf16
    h = jnp.dot(x, w1_ref[...], preferred_element_type=jnp.float32)
    h = jnp.maximum(h + b1_ref[...], 0.0)                          # bias + ReLU, f32
    h = h.astype(jnp.bfloat16)                                     # bf16 path for 2nd MXU pass
    y = jnp.dot(h, w2_ref[...], preferred_element_type=jnp.float32)
    y = y + b2_ref[...]                                            # (TB, feat) f32
    # sigmoid(y) = 1 / (1 + exp(-y)); exp + approx recip both go to the EUP slot.
    o_ref[...] = pl.reciprocal(1.0 + jnp.exp(-y), approx=True)


def cross_zero_net_dense_forward(x, w1, b1, w2, b2, *, tb=512):
    """x: (B, C, Y, X) float32. Returns (B, 1, Y_LEN, X_LEN) float32.

    w1: (Y*X, H)  b1: (H,)   -- first Linear, pre-transposed to (in, out)
    w2: (H, Y*X)  b2: (Y*X,) -- second Linear, pre-transposed to (in, out)
    tb: batch tile size (rounded to a multiple of 8; 512-2048 keeps VMEM use
        tiny even on v7x's 64 MiB while giving the DMA pipeline room).
    """
    b = x.shape[0]
    feat = _FEAT

    # bf16 activations/weights for the MXU; biases stay f32 for the epilogue.
    x_flat = x.reshape(b, -1).astype(jnp.bfloat16)                 # (B, feat)
    w1_bf = w1.astype(jnp.bfloat16)
    w2_bf = w2.astype(jnp.bfloat16)
    b1_2d = b1.reshape(1, -1).astype(jnp.float32)
    b2_2d = b2.reshape(1, -1).astype(jnp.float32)

    # Batch tile: don't over-tile tiny batches, keep sublane (8) alignment.
    tb = int(min(tb, _round_up(b, 8)))
    tb = _round_up(tb, 8)
    padded_b = _round_up(b, tb)
    if padded_b != b:
        x_flat = jnp.pad(x_flat, ((0, padded_b - b), (0, 0)))
    grid = (padded_b // tb,)

    cost = pl.CostEstimate(
        flops=4 * padded_b * feat * N_HIDDEN,          # two matmuls, 2*M*N*K each
        transcendentals=padded_b * feat,               # exp in the sigmoid
        bytes_accessed=(padded_b * feat * 2            # x (bf16) in
                        + padded_b * feat * 4          # out (f32)
                        + 2 * feat * N_HIDDEN * 2      # both weights (bf16)
                        + (N_HIDDEN + feat) * 4),      # biases (f32)
    )

    out_flat = pl.pallas_call(
        _mlp_kernel,
        out_shape=jax.ShapeDtypeStruct((padded_b, feat), jnp.float32),
        grid=grid,
        in_specs=[
            pl.BlockSpec((tb, feat), lambda i: (i, 0)),            # x (batch-tiled)
            pl.BlockSpec((feat, N_HIDDEN), lambda i: (0, 0)),      # W1^T (resident)
            pl.BlockSpec((1, N_HIDDEN), lambda i: (0, 0)),         # b1   (resident)
            pl.BlockSpec((N_HIDDEN, feat), lambda i: (0, 0)),      # W2^T (resident)
            pl.BlockSpec((1, feat), lambda i: (0, 0)),             # b2   (resident)
        ],
        out_specs=pl.BlockSpec((tb, feat), lambda i: (i, 0)),
        compiler_params=pltpu.CompilerParams(
            dimension_semantics=("parallel",)),                    # megacore on v7x
        cost_estimate=cost,
    )(x_flat, w1_bf, b1_2d, w2_bf, b2_2d)

    return out_flat[:b].reshape(b, 1, Y_LEN, X_LEN)


def _reference(x, w1, b1, w2, b2, *, mirror_bf16):
    """Pure-JAX reference. mirror_bf16=True replicates the kernel's bf16 casts."""
    b = x.shape[0]
    xf = x.reshape(b, -1).astype(jnp.float32)
    if mirror_bf16:
        xf = xf.astype(jnp.bfloat16).astype(jnp.float32)
        w1 = w1.astype(jnp.bfloat16).astype(jnp.float32)
        w2 = w2.astype(jnp.bfloat16).astype(jnp.float32)
        h = jnp.maximum(xf @ w1 + b1, 0.0)
        h = h.astype(jnp.bfloat16).astype(jnp.float32)
    else:
        h = jnp.maximum(xf @ w1 + b1, 0.0)
    y = h @ w2 + b2
    return jax.nn.sigmoid(y).reshape(b, 1, Y_LEN, X_LEN)


def _init_params(key):
    """Deterministic init matching torch.nn.Linear default (U[-1/sqrt(fan_in), +])."""
    feat = _FEAT
    k1, k2, k3, k4 = jax.random.split(key, 4)
    bound1 = 1.0 / jnp.sqrt(feat)
    bound2 = 1.0 / jnp.sqrt(N_HIDDEN)
    # stored pre-transposed as (in, out) for the kernel
    w1 = jax.random.uniform(k1, (feat, N_HIDDEN), jnp.float32, -bound1, bound1)
    b1 = jax.random.uniform(k2, (N_HIDDEN,), jnp.float32, -bound1, bound1)
    w2 = jax.random.uniform(k3, (N_HIDDEN, feat), jnp.float32, -bound2, bound2)
    b2 = jax.random.uniform(k4, (feat,), jnp.float32, -bound2, bound2)
    return w1, b1, w2, b2


if __name__ == "__main__":
    key = jax.random.PRNGKey(0)
    k_x1, k_x2, k_p = jax.random.split(key, 3)

    w1, b1, w2, b2 = _init_params(k_p)

    # --- Pipelined path: several grid steps over a batch of boards ----------
    batch = 512
    x = jax.random.randint(k_x1, (batch, 1, Y_LEN, X_LEN), -1, 2).astype(jnp.float32)
    out = jax.block_until_ready(
        cross_zero_net_dense_forward(x, w1, b1, w2, b2, tb=128))   # grid = (4,)

    ref_mirror = _reference(x, w1, b1, w2, b2, mirror_bf16=True)
    ref_module = _reference(x, w1, b1, w2, b2, mirror_bf16=False)
    assert out.shape == (batch, 1, Y_LEN, X_LEN)
    assert jnp.allclose(out, ref_mirror, atol=2e-3), "mismatch vs bf16-mirrored reference"
    assert jnp.allclose(out, ref_module, atol=3e-2), "mismatch vs f32 module semantics"

    # --- Tiny-batch path: exercises wrapper padding / single small tile -----
    batch2 = 2
    x2 = jax.random.randint(k_x2, (batch2, 1, Y_LEN, X_LEN), -1, 2).astype(jnp.float32)
    out2 = jax.block_until_ready(cross_zero_net_dense_forward(x2, w1, b1, w2, b2))
    ref2 = _reference(x2, w1, b1, w2, b2, mirror_bf16=True)
    assert out2.shape == (batch2, 1, Y_LEN, X_LEN)
    assert jnp.allclose(out2, ref2, atol=2e-3), "mismatch vs reference (tiny batch)"

    print("KERNEL_OK")
</pallas_src>

<mosaic_0001>
module attributes {stable_mosaic.version = 11 : i64} {
  func.func @_mlp_kernel(%arg0: i32, %arg1: memref<128x9xbf16, #tpu.memory_space<vmem>>, %arg2: memref<9x30xbf16, #tpu.memory_space<vmem>>, %arg3: memref<1x30xf32, #tpu.memory_space<vmem>>, %arg4: memref<30x9xbf16, #tpu.memory_space<vmem>>, %arg5: memref<1x9xf32, #tpu.memory_space<vmem>>, %arg6: memref<128x9xf32, #tpu.memory_space<vmem>>) attributes {dimension_semantics = [#tpu.dimension_semantics<parallel>], iteration_bounds = array<i64: 4>, scalar_prefetch = 0 : i64, scratch_operands = 0 : i64, tpu.core_type = #tpu.core_type<tc>, window_params = [{transform_indices = @transform_0, window_bounds = array<i64: 128, 9>}, {pipeline_mode = #tpu.pipeline_mode<synchronous>, transform_indices = @transform_1, window_bounds = array<i64: 9, 30>}, {pipeline_mode = #tpu.pipeline_mode<synchronous>, transform_indices = @transform_2, window_bounds = array<i64: 1, 30>}, {pipeline_mode = #tpu.pipeline_mode<synchronous>, transform_indices = @transform_3, window_bounds = array<i64: 30, 9>}, {pipeline_mode = #tpu.pipeline_mode<synchronous>, transform_indices = @transform_4, window_bounds = array<i64: 1, 9>}, {transform_indices = @transform_5, window_bounds = array<i64: 128, 9>}]} {
    %c0 = arith.constant 0 : index
    %c0_0 = arith.constant 0 : index
    %0 = vector.load %arg1[%c0, %c0_0] : memref<128x9xbf16, #tpu.memory_space<vmem>>, vector<128x9xbf16>
    %c0_1 = arith.constant 0 : index
    %c0_2 = arith.constant 0 : index
    %1 = vector.load %arg2[%c0_1, %c0_2] : memref<9x30xbf16, #tpu.memory_space<vmem>>, vector<9x30xbf16>
    %cst = arith.constant dense<0.000000e+00> : vector<128x30xf32>
    %2 = tpu.matmul %0, %1, %cst {dimension_numbers = #tpu.dot_dimension_numbers<[1], [0], [0], [1], [0, 0, 1, 1], [], []>} : vector<128x9xbf16>, vector<9x30xbf16>, vector<128x30xf32> -> vector<128x30xf32>
    %c0_3 = arith.constant 0 : index
    %c0_4 = arith.constant 0 : index
    %3 = vector.load %arg3[%c0_3, %c0_4] : memref<1x30xf32, #tpu.memory_space<vmem>>, vector<1x30xf32>
    %4 = vector.broadcast %3 : vector<1x30xf32> to vector<128x30xf32>
    %5 = arith.addf %2, %4 : vector<128x30xf32>
    %cst_5 = arith.constant 0.000000e+00 : f32
    %6 = vector.broadcast %cst_5 : f32 to vector<128x30xf32>
    %7 = arith.maximumf %5, %6 : vector<128x30xf32>
    %8 = arith.truncf %7 : vector<128x30xf32> to vector<128x30xbf16>
    %c0_6 = arith.constant 0 : index
    %c0_7 = arith.constant 0 : index
    %9 = vector.load %arg4[%c0_6, %c0_7] : memref<30x9xbf16, #tpu.memory_space<vmem>>, vector<30x9xbf16>
    %cst_8 = arith.constant dense<0.000000e+00> : vector<128x9xf32>
    %10 = tpu.matmul %8, %9, %cst_8 {dimension_numbers = #tpu.dot_dimension_numbers<[1], [0], [0], [1], [0, 0, 1, 1], [], []>} : vector<128x30xbf16>, vector<30x9xbf16>, vector<128x9xf32> -> vector<128x9xf32>
    %c0_9 = arith.constant 0 : index
    %c0_10 = arith.constant 0 : index
    %11 = vector.load %arg5[%c0_9, %c0_10] : memref<1x9xf32, #tpu.memory_space<vmem>>, vector<1x9xf32>
    %12 = vector.broadcast %11 : vector<1x9xf32> to vector<128x9xf32>
    %13 = arith.addf %10, %12 : vector<128x9xf32>
    %cst_11 = arith.constant 0.000000e+00 : f32
    %14 = vector.broadcast %cst_11 : f32 to vector<128x9xf32>
    %15 = arith.subf %14, %13 : vector<128x9xf32>
    %16 = math.exp %15 : vector<128x9xf32>
    %cst_12 = arith.constant 1.000000e+00 : f32
    %17 = vector.broadcast %cst_12 : f32 to vector<128x9xf32>
    %18 = arith.addf %17, %16 : vector<128x9xf32>
    %19 = tpu.reciprocal %18 {approx = true} : vector<128x9xf32> -> vector<128x9xf32>
    %c0_13 = arith.constant 0 : index
    %c0_14 = arith.constant 0 : index
    %20 = vector.load %arg6[%c0_13, %c0_14] : memref<128x9xf32, #tpu.memory_space<vmem>>, vector<128x9xf32>
    tpu.vector_store %arg6[%c0_13, %c0_14], %19 {strides = array<i32>} : memref<128x9xf32, #tpu.memory_space<vmem>>, vector<128x9xf32>,
    return
  }
  func.func @transform_0(%arg0: i32) -> (i32, i32) {
    %c0_i32 = arith.constant 0 : i32
    %c0_i32_0 = arith.constant 0 : i32
    return %arg0, %c0_i32 : i32, i32
  }
  func.func @transform_1(%arg0: i32) -> (i32, i32) {
    %c0_i32 = arith.constant 0 : i32
    %c0_i32_0 = arith.constant 0 : i32
    %c0_i32_1 = arith.constant 0 : i32
    return %c0_i32, %c0_i32_0 : i32, i32
  }
  func.func @transform_2(%arg0: i32) -> (i32, i32) {
    %c0_i32 = arith.constant 0 : i32
    %c0_i32_0 = arith.constant 0 : i32
    %c0_i32_1 = arith.constant 0 : i32
    return %c0_i32, %c0_i32_0 : i32, i32
  }
  func.func @transform_3(%arg0: i32) -> (i32, i32) {
    %c0_i32 = arith.constant 0 : i32
    %c0_i32_0 = arith.constant 0 : i32
    %c0_i32_1 = arith.constant 0 : i32
    return %c0_i32, %c0_i32_0 : i32, i32
  }
  func.func @transform_4(%arg0: i32) -> (i32, i32) {
    %c0_i32 = arith.constant 0 : i32
    %c0_i32_0 = arith.constant 0 : i32
    %c0_i32_1 = arith.constant 0 : i32
    return %c0_i32, %c0_i32_0 : i32, i32
  }
  func.func @transform_5(%arg0: i32) -> (i32, i32) {
    %c0_i32 = arith.constant 0 : i32
    %c0_i32_0 = arith.constant 0 : i32
    return %arg0, %c0_i32 : i32, i32
  }
}

</mosaic_0001>

<llo_original>
// kernel: tpu_custom_call.1
$region0: #{tpu_custom_call.1}
  #allocation0 [shape = 'u32[]', space=smem, size = 0x4, offset = 0x4, fixed_abs, tag = 'smem constant byte address 0x4 - core index']
  #allocation1 [shape = 'u32[144,128]{1,0:T(1,128)}', space=vmem, size = 0x12000, scoped, tag = 'internal scratch']
  %s0 = inlined_call_operand.vmem [shape: bf16[512,9], index: 0, kind: input, shape index: {}]
  %s1 = inlined_call_operand.vmem [shape: bf16[9,30], index: 1, kind: input, shape index: {}]
  %s2 = inlined_call_operand.vmem [shape: f32[1,30], index: 2, kind: input, shape index: {}]
  %s3 = inlined_call_operand.vmem [shape: bf16[30,9], index: 3, kind: input, shape index: {}]
  %s4 = inlined_call_operand.vmem [shape: f32[1,9], index: 4, kind: input, shape index: {}]
  %s5 = inlined_call_operand.vmem [shape: f32[512,9], index: 5, kind: output, shape index: {}]
  %s6 = sld [smem:[#allocation0]]
  $region53: #{tpu_custom_call.1} parent=0
    _
  %s8 = ssub.s32 1, %s6
  %s9 = scalar_select 0, %s8, %s6
  loop: start=0, step=1, limit=6
  $region2: #{tpu_custom_call.1} parent=0 // loop_pre_header
    _
  $region3: #{tpu_custom_call.1} parent=0 // loop_header
    %s11 = sphi 0, %s15
    %p12 = scmp.ge.s32.totalorder %s11, 6
    %s21 = sphi 0, %s23
    %s24 = sphi 0, %s21
    %s25 = sphi 0, %s24
    %s41 = sphi 0, %s25
    %s45 = sphi 0, %s45
    %s47 = sphi 0, %s45
    %s48 = sphi 0, %s47
    %s62 = sphi 0, %s48
    %s66 = sphi 0, %s66
    %s68 = sphi 0, %s66
    %s69 = sphi 0, %s68
    %s83 = sphi 0, %s69
    %s87 = sphi 0, %s87
    %s89 = sphi 0, %s87
    %s90 = sphi 0, %s89
    %s104 = sphi 0, %s90
    %s108 = sphi 0, %s108
    %s110 = sphi 0, %s108
    %s111 = sphi 0, %s110
    %s125 = sphi 0, %s111
    %s131 = sphi 0, %s133
    %s134 = sphi 0, %s131
    %s135 = sphi 0, %s134
    %s151 = sphi 0, %s135
  $region4: #{tpu_custom_call.1} parent=0 // loop_header_branch
    %14 = sbr.rel (%p12) target = $region8
  $region5: #{tpu_custom_call.1} parent=0 // loop_body
    %s16 = ssub.s32 %s11, 1
    %s17 = ssub.s32 %s11, 2
    %s18 = sadd.s32 %s11, 1
    %s19 = ssub.s32 %s11, %s18
    %p20 = scmp.eq.s32.totalorder %s19, 0
    %s22 = sadd.s32 %s21, 1
    %s23 = scalar_select %p20, %s21, %s22
    %p26 = pneg %p20
    %p27 = scmp.eq.s32.totalorder %s11, 3
    %p28 = por %p26, %p27
    %p29 = scmp.ne.s32.totalorder %s21, %s24
    %p30 = scmp.eq.s32.totalorder %s11, 0
    %p31 = por %p29, %p30
    %p32 = scmp.ne.s32.totalorder %s21, %s24
    %p33 = scmp.eq.s32.totalorder %s16, 3
    %p34 = por %p32, %p33
    %p35 = scmp.ne.s32.totalorder %s24, %s25
    %p36 = scmp.eq.s32.totalorder %s16, 0
    %p37 = por %p35, %p36
    %p38 = scmp.ne.s32.totalorder %s24, %s25
    %p39 = scmp.eq.s32.totalorder %s17, 3
    %p40 = por %p38, %p39
    %p42 = scmp.ne.s32.totalorder %s25, %s41
    %p43 = scmp.eq.s32.totalorder %s17, 0
    %p44 = por %p42, %p43
    %s46 = sadd.s32 %s45, 1
    %p49 = scmp.eq.s32.totalorder %s11, 3
    %p50 = scmp.ne.s32.totalorder %s45, %s47
    %p51 = scmp.eq.s32.totalorder %s11, 0
    %p52 = por %p50, %p51
    %p53 = scmp.ne.s32.totalorder %s45, %s47
    %p54 = scmp.eq.s32.totalorder %s16, 3
    %p55 = por %p53, %p54
    %p56 = scmp.ne.s32.totalorder %s47, %s48
    %p57 = scmp.eq.s32.totalorder %s16, 0
    %p58 = por %p56, %p57
    %p59 = scmp.ne.s32.totalorder %s47, %s48
    %p60 = scmp.eq.s32.totalorder %s17, 3
    %p61 = por %p59, %p60
    %p63 = scmp.ne.s32.totalorder %s48, %s62
    %p64 = scmp.eq.s32.totalorder %s17, 0
    %p65 = por %p63, %p64
    %s67 = sadd.s32 %s66, 1
    %p70 = scmp.eq.s32.totalorder %s11, 3
    %p71 = scmp.ne.s32.totalorder %s66, %s68
    %p72 = scmp.eq.s32.totalorder %s11, 0
    %p73 = por %p71, %p72
    %p74 = scmp.ne.s32.totalorder %s66, %s68
    %p75 = scmp.eq.s32.totalorder %s16, 3
    %p76 = por %p74, %p75
    %p77 = scmp.ne.s32.totalorder %s68, %s69
    %p78 = scmp.eq.s32.totalorder %s16, 0
    %p79 = por %p77, %p78
    %p80 = scmp.ne.s32.totalorder %s68, %s69
    %p81 = scmp.eq.s32.totalorder %s17, 3
    %p82 = por %p80, %p81
    %p84 = scmp.ne.s32.totalorder %s69, %s83
    %p85 = scmp.eq.s32.totalorder %s17, 0
    %p86 = por %p84, %p85
    %s88 = sadd.s32 %s87, 1
    %p91 = scmp.eq.s32.totalorder %s11, 3
    %p92 = scmp.ne.s32.totalorder %s87, %s89
    %p93 = scmp.eq.s32.totalorder %s11, 0
    %p94 = por %p92, %p93
    %p95 = scmp.ne.s32.totalorder %s87, %s89
    %p96 = scmp.eq.s32.totalorder %s16, 3
    %p97 = por %p95, %p96
    %p98 = scmp.ne.s32.totalorder %s89, %s90
    %p99 = scmp.eq.s32.totalorder %s16, 0
    %p100 = por %p98, %p99
    %p101 = scmp.ne.s32.totalorder %s89, %s90
    %p102 = scmp.eq.s32.totalorder %s17, 3
    %p103 = por %p101, %p102
    %p105 = scmp.ne.s32.totalorder %s90, %s104
    %p106 = scmp.eq.s32.totalorder %s17, 0
    %p107 = por %p105, %p106
    %s109 = sadd.s32 %s108, 1
    %p112 = scmp.eq.s32.totalorder %s11, 3
    %p113 = scmp.ne.s32.totalorder %s108, %s110
    %p114 = scmp.eq.s32.totalorder %s11, 0
    %p115 = por %p113, %p114
    %p116 = scmp.ne.s32.totalorder %s108, %s110
    %p117 = scmp.eq.s32.totalorder %s16, 3
    %p118 = por %p116, %p117
    %p119 = scmp.ne.s32.totalorder %s110, %s111
    %p120 = scmp.eq.s32.totalorder %s16, 0
    %p121 = por %p119, %p120
    %p122 = scmp.ne.s32.totalorder %s110, %s111
    %p123 = scmp.eq.s32.totalorder %s17, 3
    %p124 = por %p122, %p123
    %p126 = scmp.ne.s32.totalorder %s111, %s125
    %p127 = scmp.eq.s32.totalorder %s17, 0
    %p128 = por %p126, %p127
    %s129 = ssub.s32 %s11, %s18
    %p130 = scmp.eq.s32.totalorder %s129, 0
    %s132 = sadd.s32 %s131, 1
    %s133 = scalar_select %p130, %s131, %s132
    %p136 = pneg %p130
    %p137 = scmp.eq.s32.totalorder %s11, 3
    %p138 = por %p136, %p137
    %p139 = scmp.ne.s32.totalorder %s131, %s134
    %p140 = scmp.eq.s32.totalorder %s11, 0
    %p141 = por %p139, %p140
    %p142 = scmp.ne.s32.totalorder %s131, %s134
    %p143 = scmp.eq.s32.totalorder %s16, 3
    %p144 = por %p142, %p143
    %p145 = scmp.ne.s32.totalorder %s134, %s135
    %p146 = scmp.eq.s32.totalorder %s16, 0
    %p147 = por %p145, %p146
    %p148 = scmp.ne.s32.totalorder %s134, %s135
    %p149 = scmp.eq.s32.totalorder %s17, 3
    %p150 = por %p148, %p149
    %p152 = scmp.ne.s32.totalorder %s135, %s151
    %p153 = scmp.eq.s32.totalorder %s17, 0
    %p154 = por %p152, %p153
    %p155 = scmp.le.s32.totalorder 1, %s11
    %p156 = scmp.lt.s32.totalorder %s11, 5
    %p157 = pnand %p155, %p156
    %p158 = pneg %p157
    // Predicated region
    $region9: #{tpu_custom_call.1} parent=5 // pred_check
      _
    $region10: #{tpu_custom_call.1} parent=5 // pred_check_branch
      %160 = sbr.rel (%p157) target = $region12
    $region11: #{tpu_custom_call.1} parent=5 // pred_region
      %s161 = ssub.s32 %s11, 1
      // Predicated region
      $region13: #{tpu_custom_call.1} parent=11 // pred_check
        %p162 = pneg %p58
      $region14: #{tpu_custom_call.1} parent=11 // pred_check_branch
        %164 = sbr.rel (%p162) target = $region16
      $region15: #{tpu_custom_call.1} parent=11 // pred_region
        _
      $region16: #{tpu_custom_call.1} parent=11 // pred_fallthru
        _
      // Predicated region
      $region17: #{tpu_custom_call.1} parent=11 // pred_check
        %p165 = pneg %p79
      $region18: #{tpu_custom_call.1} parent=11 // pred_check_branch
        %167 = sbr.rel (%p165) target = $region20
      $region19: #{tpu_custom_call.1} parent=11 // pred_region
        _
      $region20: #{tpu_custom_call.1} parent=11 // pred_fallthru
        _
      // Predicated region
      $region21: #{tpu_custom_call.1} parent=11 // pred_check
        %p168 = pneg %p100
      $region22: #{tpu_custom_call.1} parent=11 // pred_check_branch
        %170 = sbr.rel (%p168) target = $region24
      $region23: #{tpu_custom_call.1} parent=11 // pred_region
        _
      $region24: #{tpu_custom_call.1} parent=11 // pred_fallthru
        _
      // Predicated region
      $region25: #{tpu_custom_call.1} parent=11 // pred_check
        %p171 = pneg %p121
      $region26: #{tpu_custom_call.1} parent=11 // pred_check_branch
        %173 = sbr.rel (%p171) target = $region28
      $region27: #{tpu_custom_call.1} parent=11 // pred_region
        _
      $region28: #{tpu_custom_call.1} parent=11 // pred_fallthru
        _
    $region12: #{tpu_custom_call.1} parent=5 // pred_fallthru
      _
    %p174 = scmp.lt.s32.totalorder %s11, 4
    // Predicated region
    $region29: #{tpu_custom_call.1} parent=5 // pred_check
      %p175 = pneg %p174
    $region30: #{tpu_custom_call.1} parent=5 // pred_check_branch
      %177 = sbr.rel (%p175) target = $region32
    $region31: #{tpu_custom_call.1} parent=5 // pred_region
      // Predicated region
      $region33: #{tpu_custom_call.1} parent=31 // pred_check
        %p178 = pneg %p31
      $region34: #{tpu_custom_call.1} parent=31 // pred_check_branch
        %180 = sbr.rel (%p178) target = $region36
      $region35: #{tpu_custom_call.1} parent=31 // pred_region
        %s181 = smul.u32 16, %s11
        %p182 = scmp.lt.s32.totalorder %s181, 63
        %s183 = scalar_select %p182, %s181, 63
        %s184 = smul.addr %s183, 4
        %s185 = scalar_lea.vmem %s0, %s184
        %s186 = smul.u32 16, %s11
      $region36: #{tpu_custom_call.1} parent=31 // pred_fallthru
        _
    $region32: #{tpu_custom_call.1} parent=5 // pred_fallthru
      _
    %p187 = scmp.le.s32.totalorder 1, %s11
    %p188 = scmp.lt.s32.totalorder %s11, 5
    %p189 = pnand %p187, %p188
    %p190 = pneg %p189
    // Predicated region
    $region37: #{tpu_custom_call.1} parent=5 // pred_check
      _
    $region38: #{tpu_custom_call.1} parent=5 // pred_check_branch
      %192 = sbr.rel (%p189) target = $region40
    $region39: #{tpu_custom_call.1} parent=5 // pred_region
      %s193 = ssub.s32 %s11, 1
      %s194 = smul.u32 16, %s16
      %p195 = scmp.lt.s32.totalorder %s194, 63
      %s196 = scalar_select %p195, %s194, 63
      %s197 = smul.addr %s196, 4
      %s198 = scalar_lea.vmem %s0, %s197
      %p199 = pneg %p37
      %p200 = pneg %p34
      %p201 = pneg %p58
      %p202 = pneg %p55
      %p203 = pneg %p79
      %p204 = pneg %p76
      %p205 = pneg %p100
      %p206 = pneg %p97
      %p207 = pneg %p121
      %p208 = pneg %p118
      %p209 = pneg %p147
      %p210 = pneg %p144
      %s211 = smul.u32 16, %s16
      %p212 = scmp.lt.s32.totalorder %s211, 63
      %s213 = scalar_select %p212, %s211, 63
      %s214 = smul.addr %s213, 8
      %s215 = scalar_lea.vmem %s5, %s214
      %s216 = smul.u32 16, %s16
      %p217 = scmp.lt.s32.totalorder %s216, 63
      %s218 = scalar_select %p217, %s216, 63
      %s219 = smul.addr %s218, 4
      %s220 = scalar_lea.vmem %s0, %s219
      %s221 = smul.u32 16, %s16
      %s222 = smul.u32 16, %s16
      %p223 = scmp.lt.s32.totalorder %s222, 63
      %s224 = scalar_select %p223, %s222, 63
      %s225 = smul.addr %s224, 8
      %s226 = scalar_lea.vmem %s5, %s225
      %s227 = smul.u32 16, %s16
      %v229 = vld [vmem:[%s220] sm:$0xf]
      %v230 = vld [vmem:[%s220 + $0x4] sm:$0xf]
      %v231 = vld [vmem:[%s220 + $0x8] sm:$0xf]
      %v232 = vld [vmem:[%s220 + $0xc] sm:$0xf]
      %v233 = vld [vmem:[%s220 + $0x10] sm:$0xf]
      %v234 = vld [vmem:[%s220 + $0x14] sm:$0xf]
      %v235 = vld [vmem:[%s220 + $0x18] sm:$0xf]
      %v236 = vld [vmem:[%s220 + $0x1c] sm:$0xf]
      %v237 = vld [vmem:[%s220 + $0x20] sm:$0xf]
      %v238 = vld [vmem:[%s220 + $0x24] sm:$0xf]
      %v239 = vld [vmem:[%s220 + $0x28] sm:$0xf]
      %v240 = vld [vmem:[%s220 + $0x2c] sm:$0xf]
      %v241 = vld [vmem:[%s220 + $0x30] sm:$0xf]
      %v242 = vld [vmem:[%s220 + $0x34] sm:$0xf]
      %v243 = vld [vmem:[%s220 + $0x38] sm:$0xf]
      %v244 = vld [vmem:[%s220 + $0x3c] sm:$0xf]
      %v245 = vld [vmem:[%s1] sm:$0xf]
      %v246 = vld [vmem:[%s1 + $0x4] sm:$0x1]
      %v247 = vld [vmem:[%s2] sm:$0x1]
      %v249 = vlaneseq
      %v250 = vshrl.u32 %v249, 7
      %v251 = vsub.s32 0, %v250
      %v252 = vrot.slane %v247, %v251
      %v270 = vunpack.c.l.b16 %v229
      %v271 = vunpack.c.l.b16 %v230
      %v272 = vunpack.c.l.b16 %v231
      %v273 = vunpack.c.l.b16 %v232
      %v274 = vunpack.c.l.b16 %v233
      %v275 = vunpack.c.l.b16 %v234
      %v276 = vunpack.c.l.b16 %v235
      %v277 = vunpack.c.l.b16 %v236
      %v278 = vunpack.c.l.b16 %v237
      %v279 = vunpack.c.l.b16 %v238
      %v280 = vunpack.c.l.b16 %v239
      %v281 = vunpack.c.l.b16 %v240
      %v282 = vunpack.c.l.b16 %v241
      %v283 = vunpack.c.l.b16 %v242
      %v284 = vunpack.c.l.b16 %v243
      %v285 = vunpack.c.l.b16 %v244
      %v286 = vpack.c.b16 %v271, %v270
      %v287 = vpack.c.b16 %v273, %v272
      %v288 = vpack.c.b16 %v275, %v274
      %v289 = vpack.c.b16 %v277, %v276
      %v290 = vpack.c.b16 %v279, %v278
      %v291 = vpack.c.b16 %v281, %v280
      %v292 = vpack.c.b16 %v283, %v282
      %v293 = vpack.c.b16 %v285, %v284
      %v296 = vunpack.c.l.b16 %v245
      %v297 = vunpack.c.l.b16 %v246
      %v298 = vpack.c.b16 %v297, %v296
      %vm299 = vcmask 72704
      %v301 = vsel %vm299, %v286, 0
      %v304 = vsel %vm299, %v287, 0
      %v307 = vsel %vm299, %v288, 0
      %v310 = vsel %vm299, %v289, 0
      %v313 = vsel %vm299, %v290, 0
      %v316 = vsel %vm299, %v291, 0
      %v319 = vsel %vm299, %v292, 0
      %v322 = vsel %vm299, %v293, 0
      %vm324 = vcmask 1043456
      %vm325 = vcmask 1044480
      %v326 = vsel %vm324, 4294967295, 65535
      %v327 = vsel %vm325, %v326, 0
      %v329 = vand.u32 %v298, %v327
      %331 = vmatprep.subr.bf16.mxu0 0
      %332 = vmatpush1.bf16.msra.mxu0 0
      %333 = vmatprep.subr.bf16.mxu0 0
      %334 = vmatpush1.bf16.msra.mxu0 0
      %335 = vmatprep.subr.bf16.mxu0 0
      %336 = vmatpush1.bf16.msra.mxu0 0
      %337 = vmatprep.subr.bf16.mxu0 0
      %338 = vmatpush1.bf16.msra.mxu0 0
      %339 = vmatprep.subr.bf16.mxu0 0
      %340 = vmatpush1.bf16.msra.mxu0 0
      %341 = vmatprep.subr.bf16.mxu0 0
      %342 = vmatpush1.bf16.msra.mxu0 0
      %343 = vmatprep.subr.bf16.mxu0 0
      %344 = vmatpush1.bf16.msra.mxu0 0
      %345 = vmatprep.subr.bf16.mxu0 0
      %346 = vmatpush1.bf16.msra.mxu0 %v329
      %347 = vmatprep.subr.bf16.mxu0 0
      %348 = vmatpush2.bf16.msra.mxu0 0
      %349 = vmatprep.subr.bf16.mxu0 0
      %350 = vmatpush2.bf16.msra.mxu0 0
      %351 = vmatprep.subr.bf16.mxu0 0
      %352 = vmatpush2.bf16.msra.mxu0 0
      %353 = vmatprep.subr.bf16.mxu0 0
      %354 = vmatpush2.bf16.msra.mxu0 0
      %355 = vmatprep.subr.bf16.mxu0 0
      %356 = vmatpush2.bf16.msra.mxu0 0
      %357 = vmatprep.subr.bf16.mxu0 0
      %358 = vmatpush2.bf16.msra.mxu0 0
      %359 = vmatprep.subr.bf16.mxu0 0
      %360 = vmatpush2.bf16.msra.mxu0 0
      %361 = vmatprep.subr.bf16.mxu0 0
      %362 = vmatpush2.bf16.msra.mxu0 0
      %363 = vmatprep.mubr.bf16.mxu0 0
      %364 = vmatmul.mubr.bf16.gmra.mxu0 %v301
      %v365 = vpop.f32.mrf.mxu0
      %v366 = vadd.f32 %v252, %v365
      %v367 = vpop.f32.mrf.mxu0
      %v368 = vpop.f32.mrf.mxu0
      %v369 = vadd.f32 %v252, %v368
      %v370 = vpop.f32.mrf.mxu0
      %371 = vmatprep.mubr.bf16.mxu0 0
      %372 = vmatmul.mubr.bf16.gmra.mxu0 %v304
      %v373 = vpop.f32.mrf.mxu0
      %v374 = vadd.f32 %v252, %v373
      %v375 = vpop.f32.mrf.mxu0
      %v376 = vpop.f32.mrf.mxu0
      %v377 = vadd.f32 %v252, %v376
      %v378 = vpop.f32.mrf.mxu0
      %379 = vmatprep.mubr.bf16.mxu0 0
      %380 = vmatmul.mubr.bf16.gmra.mxu0 %v307
      %v381 = vpop.f32.mrf.mxu0
      %v382 = vadd.f32 %v252, %v381
      %v383 = vpop.f32.mrf.mxu0
      %v384 = vpop.f32.mrf.mxu0
      %v385 = vadd.f32 %v252, %v384
      %v386 = vpop.f32.mrf.mxu0
      %387 = vmatprep.mubr.bf16.mxu0 0
      %388 = vmatmul.mubr.bf16.gmra.mxu0 %v310
      %v389 = vpop.f32.mrf.mxu0
      %v390 = vadd.f32 %v252, %v389
      %v391 = vpop.f32.mrf.mxu0
      %v392 = vpop.f32.mrf.mxu0
      %v393 = vadd.f32 %v252, %v392
      %v394 = vpop.f32.mrf.mxu0
      %395 = vmatprep.mubr.bf16.mxu0 0
      %396 = vmatmul.mubr.bf16.gmra.mxu0 %v313
      %v397 = vpop.f32.mrf.mxu0
      %v398 = vadd.f32 %v252, %v397
      %v399 = vpop.f32.mrf.mxu0
      %v400 = vpop.f32.mrf.mxu0
      %v401 = vadd.f32 %v252, %v400
      %v402 = vpop.f32.mrf.mxu0
      %403 = vmatprep.mubr.bf16.mxu0 0
      %404 = vmatmul.mubr.bf16.gmra.mxu0 %v316
      %v405 = vpop.f32.mrf.mxu0
      %v406 = vadd.f32 %v252, %v405
      %v407 = vpop.f32.mrf.mxu0
      %v408 = vpop.f32.mrf.mxu0
      %v409 = vadd.f32 %v252, %v408
      %v410 = vpop.f32.mrf.mxu0
      %411 = vmatprep.mubr.bf16.mxu0 0
      %412 = vmatmul.mubr.bf16.gmra.mxu0 %v319
      %v413 = vpop.f32.mrf.mxu0
      %v414 = vadd.f32 %v252, %v413
      %v415 = vpop.f32.mrf.mxu0
      %v416 = vpop.f32.mrf.mxu0
      %v417 = vadd.f32 %v252, %v416
      %v418 = vpop.f32.mrf.mxu0
      %419 = vmatprep.mubr.bf16.mxu0 0
      %420 = vmatmul.mubr.bf16.gmra.mxu0 %v322
      %v421 = vpop.f32.mrf.mxu0
      %v422 = vadd.f32 %v252, %v421
      %v423 = vpop.f32.mrf.mxu0
      %v424 = vpop.f32.mrf.mxu0
      %v425 = vadd.f32 %v252, %v424
      %v426 = vpop.f32.mrf.mxu0
      %427 = vdwg.mxu0
      %v428 = vmax.f32 %v366, 0.0
      %v429 = vmax.f32 %v369, 0.0
      %v430 = vmax.f32 %v374, 0.0
      %v431 = vmax.f32 %v377, 0.0
      %v432 = vmax.f32 %v382, 0.0
      %v433 = vmax.f32 %v385, 0.0
      %v434 = vmax.f32 %v390, 0.0
      %v435 = vmax.f32 %v393, 0.0
      %v436 = vmax.f32 %v398, 0.0
      %v437 = vmax.f32 %v401, 0.0
      %v438 = vmax.f32 %v406, 0.0
      %v439 = vmax.f32 %v409, 0.0
      %v440 = vmax.f32 %v414, 0.0
      %v441 = vmax.f32 %v417, 0.0
      %v442 = vmax.f32 %v422, 0.0
      %v443 = vmax.f32 %v425, 0.0
      %v444 = vpack.c.bf16 %v429, %v428
      %v445 = vpack.c.bf16 %v431, %v430
      %v446 = vpack.c.bf16 %v433, %v432
      %v447 = vpack.c.bf16 %v435, %v434
      %v448 = vpack.c.bf16 %v437, %v436
      %v449 = vpack.c.bf16 %v439, %v438
      %v450 = vpack.c.bf16 %v441, %v440
      %v451 = vpack.c.bf16 %v443, %v442
      %v452 = vld [vmem:[%s3] sm:$0xf]
      %v453 = vld [vmem:[%s3 + $0x4] sm:$0xf]
      %v454 = vld [vmem:[%s3 + $0x8] sm:$0xf]
      %v455 = vld [vmem:[%s3 + $0xc] sm:$0x7]
      %v456 = vld [vmem:[%s4] sm:$0x1]
      %v458 = vlaneseq
      %v459 = vshrl.u32 %v458, 7
      %v460 = vsub.s32 0, %v459
      %v461 = vrot.slane %v456, %v460
      %v467 = vunpack.c.l.b16 %v452
      %v468 = vunpack.c.l.b16 %v453
      %v469 = vunpack.c.l.b16 %v454
      %v470 = vunpack.c.l.b16 %v455
      %v471 = vpack.c.b16 %v468, %v467
      %v472 = vpack.c.b16 %v470, %v469
      %vm474 = vcmask 244736
      %v476 = vsel %vm474, %v444, 0
      %v479 = vsel %vm474, %v445, 0
      %v482 = vsel %vm474, %v446, 0
      %v485 = vsel %vm474, %v447, 0
      %v488 = vsel %vm474, %v448, 0
      %v491 = vsel %vm474, %v449, 0
      %v494 = vsel %vm474, %v450, 0
      %v497 = vsel %vm474, %v451, 0
      %vm499 = vcmask 1046528
      %v501 = vsel %vm499, %v472, 0
      %503 = vmatprep.subr.bf16.mxu0 0
      %504 = vmatpush1.bf16.msra.mxu0 0
      %505 = vmatprep.subr.bf16.mxu0 0
      %506 = vmatpush1.bf16.msra.mxu0 0
      %507 = vmatprep.subr.bf16.mxu0 0
      %508 = vmatpush1.bf16.msra.mxu0 0
      %509 = vmatprep.subr.bf16.mxu0 0
      %510 = vmatpush1.bf16.msra.mxu0 0
      %511 = vmatprep.subr.bf16.mxu0 0
      %512 = vmatpush1.bf16.msra.mxu0 0
      %513 = vmatprep.subr.bf16.mxu0 0
      %514 = vmatpush1.bf16.msra.mxu0 0
      %515 = vmatprep.subr.bf16.mxu0 0
      %516 = vmatpush1.bf16.msra.mxu0 %v501
      %517 = vmatprep.subr.bf16.mxu0 0
      %518 = vmatpush1.bf16.msra.mxu0 %v471
      %519 = vmatprep.subr.bf16.mxu0 0
      %520 = vmatpush2.bf16.msra.mxu0 0
      %521 = vmatprep.subr.bf16.mxu0 0
      %522 = vmatpush2.bf16.msra.mxu0 0
      %523 = vmatprep.subr.bf16.mxu0 0
      %524 = vmatpush2.bf16.msra.mxu0 0
      %525 = vmatprep.subr.bf16.mxu0 0
      %526 = vmatpush2.bf16.msra.mxu0 0
      %527 = vmatprep.subr.bf16.mxu0 0
      %528 = vmatpush2.bf16.msra.mxu0 0
      %529 = vmatprep.subr.bf16.mxu0 0
      %530 = vmatpush2.bf16.msra.mxu0 0
      %531 = vmatprep.subr.bf16.mxu0 0
      %532 = vmatpush2.bf16.msra.mxu0 0
      %533 = vmatprep.subr.bf16.mxu0 0
      %534 = vmatpush2.bf16.msra.mxu0 0
      %535 = vmatprep.mubr.bf16.mxu0 0
      %536 = vmatmul.mubr.bf16.gmra.mxu0 %v476
      %v537 = vpop.f32.mrf.mxu0
      %v538 = vadd.f32 %v461, %v537
      %v539 = vpop.f32.mrf.mxu0
      %v540 = vpop.f32.mrf.mxu0
      %v541 = vadd.f32 %v461, %v540
      %v542 = vpop.f32.mrf.mxu0
      %543 = vmatprep.mubr.bf16.mxu0 0
      %544 = vmatmul.mubr.bf16.gmra.mxu0 %v479
      %v545 = vpop.f32.mrf.mxu0
      %v546 = vadd.f32 %v461, %v545
      %v547 = vpop.f32.mrf.mxu0
      %v548 = vpop.f32.mrf.mxu0
      %v549 = vadd.f32 %v461, %v548
      %v550 = vpop.f32.mrf.mxu0
      %551 = vmatprep.mubr.bf16.mxu0 0
      %552 = vmatmul.mubr.bf16.gmra.mxu0 %v482
      %v553 = vpop.f32.mrf.mxu0
      %v554 = vadd.f32 %v461, %v553
      %v555 = vpop.f32.mrf.mxu0
      %v556 = vpop.f32.mrf.mxu0
      %v557 = vadd.f32 %v461, %v556
      %v558 = vpop.f32.mrf.mxu0
      %559 = vmatprep.mubr.bf16.mxu0 0
      %560 = vmatmul.mubr.bf16.gmra.mxu0 %v485
      %v561 = vpop.f32.mrf.mxu0
      %v562 = vadd.f32 %v461, %v561
      %v563 = vpop.f32.mrf.mxu0
      %v564 = vpop.f32.mrf.mxu0
      %v565 = vadd.f32 %v461, %v564
      %v566 = vpop.f32.mrf.mxu0
      %567 = vmatprep.mubr.bf16.mxu0 0
      %568 = vmatmul.mubr.bf16.gmra.mxu0 %v488
      %v569 = vpop.f32.mrf.mxu0
      %v570 = vadd.f32 %v461, %v569
      %v571 = vpop.f32.mrf.mxu0
      %v572 = vpop.f32.mrf.mxu0
      %v573 = vadd.f32 %v461, %v572
      %v574 = vpop.f32.mrf.mxu0
      %575 = vmatprep.mubr.bf16.mxu0 0
      %576 = vmatmul.mubr.bf16.gmra.mxu0 %v491
      %v577 = vpop.f32.mrf.mxu0
      %v578 = vadd.f32 %v461, %v577
      %v579 = vpop.f32.mrf.mxu0
      %v580 = vpop.f32.mrf.mxu0
      %v581 = vadd.f32 %v461, %v580
      %v582 = vpop.f32.mrf.mxu0
      %583 = vmatprep.mubr.bf16.mxu0 0
      %584 = vmatmul.mubr.bf16.gmra.mxu0 %v494
      %v585 = vpop.f32.mrf.mxu0
      %v586 = vadd.f32 %v461, %v585
      %v587 = vpop.f32.mrf.mxu0
      %v588 = vpop.f32.mrf.mxu0
      %v589 = vadd.f32 %v461, %v588
      %v590 = vpop.f32.mrf.mxu0
      %591 = vmatprep.mubr.bf16.mxu0 0
      %592 = vmatmul.mubr.bf16.gmra.mxu0 %v497
      %v593 = vpop.f32.mrf.mxu0
      %v594 = vadd.f32 %v461, %v593
      %v595 = vpop.f32.mrf.mxu0
      %v596 = vpop.f32.mrf.mxu0
      %v597 = vadd.f32 %v461, %v596
      %v598 = vpop.f32.mrf.mxu0
      %599 = vdwg.mxu0
      %v600 = vsub.f32 0.0, %v538
      %v601 = vsub.f32 0.0, %v541
      %v602 = vsub.f32 0.0, %v546
      %v603 = vsub.f32 0.0, %v549
      %v604 = vsub.f32 0.0, %v554
      %v605 = vsub.f32 0.0, %v557
      %v606 = vsub.f32 0.0, %v562
      %v607 = vsub.f32 0.0, %v565
      %v608 = vsub.f32 0.0, %v570
      %v609 = vsub.f32 0.0, %v573
      %v610 = vsub.f32 0.0, %v578
      %v611 = vsub.f32 0.0, %v581
      %v612 = vsub.f32 0.0, %v586
      %v613 = vsub.f32 0.0, %v589
      %v614 = vsub.f32 0.0, %v594
      %v615 = vsub.f32 0.0, %v597
      %v616 = vmul.f32 %v600, 1.442695
      %v617 = vpow.pop %v616
      %v618 = vmul.f32 %v601, 1.442695
      %v619 = vpow.pop %v618
      %v620 = vmul.f32 %v602, 1.442695
      %v621 = vpow.pop %v620
      %v622 = vmul.f32 %v603, 1.442695
      %v623 = vpow.pop %v622
      %v624 = vmul.f32 %v604, 1.442695
      %v625 = vpow.pop %v624
      %v626 = vmul.f32 %v605, 1.442695
      %v627 = vpow.pop %v626
      %v628 = vmul.f32 %v606, 1.442695
      %v629 = vpow.pop %v628
      %v630 = vmul.f32 %v607, 1.442695
      %v631 = vpow.pop %v630
      %v632 = vmul.f32 %v608, 1.442695
      %v633 = vpow.pop %v632
      %v634 = vmul.f32 %v609, 1.442695
      %v635 = vpow.pop %v634
      %v636 = vmul.f32 %v610, 1.442695
      %v637 = vpow.pop %v636
      %v638 = vmul.f32 %v611, 1.442695
      %v639 = vpow.pop %v638
      %v640 = vmul.f32 %v612, 1.442695
      %v641 = vpow.pop %v640
      %v642 = vmul.f32 %v613, 1.442695
      %v643 = vpow.pop %v642
      %v644 = vmul.f32 %v614, 1.442695
      %v645 = vpow.pop %v644
      %v646 = vmul.f32 %v615, 1.442695
      %v647 = vpow.pop %v646
      %v648 = vadd.f32 %v617, 1.0
      %v649 = vadd.f32 %v619, 1.0
      %v650 = vadd.f32 %v621, 1.0
      %v651 = vadd.f32 %v623, 1.0
      %v652 = vadd.f32 %v625, 1.0
      %v653 = vadd.f32 %v627, 1.0
      %v654 = vadd.f32 %v629, 1.0
      %v655 = vadd.f32 %v631, 1.0
      %v656 = vadd.f32 %v633, 1.0
      %v657 = vadd.f32 %v635, 1.0
      %v658 = vadd.f32 %v637, 1.0
      %v659 = vadd.f32 %v639, 1.0
      %v660 = vadd.f32 %v641, 1.0
      %v661 = vadd.f32 %v643, 1.0
      %v662 = vadd.f32 %v645, 1.0
      %v663 = vadd.f32 %v647, 1.0
      %v664 = vrcp.pop %v648
      %v665 = vrcp.pop %v649
      %v666 = vrcp.pop %v650
      %v667 = vrcp.pop %v651
      %v668 = vrcp.pop %v652
      %v669 = vrcp.pop %v653
      %v670 = vrcp.pop %v654
      %v671 = vrcp.pop %v655
      %v672 = vrcp.pop %v656
      %v673 = vrcp.pop %v657
      %v674 = vrcp.pop %v658
      %v675 = vrcp.pop %v659
      %v676 = vrcp.pop %v660
      %v677 = vrcp.pop %v661
      %v678 = vrcp.pop %v662
      %v679 = vrcp.pop %v663
      %680 = vst.msk [vmem:[%s226] sm:$0xff] %vm299, %v664
      %681 = vst.msk [vmem:[%s226 + $0x8] sm:$0xff] %vm299, %v665
      %682 = vst.msk [vmem:[%s226 + $0x10] sm:$0xff] %vm299, %v666
      %683 = vst.msk [vmem:[%s226 + $0x18] sm:$0xff] %vm299, %v667
      %684 = vst.msk [vmem:[%s226 + $0x20] sm:$0xff] %vm299, %v668
      %685 = vst.msk [vmem:[%s226 + $0x28] sm:$0xff] %vm299, %v669
      %686 = vst.msk [vmem:[%s226 + $0x30] sm:$0xff] %vm299, %v670
      %687 = vst.msk [vmem:[%s226 + $0x38] sm:$0xff] %vm299, %v671
      %688 = vst.msk [vmem:[%s226 + $0x40] sm:$0xff] %vm299, %v672
      %689 = vst.msk [vmem:[%s226 + $0x48] sm:$0xff] %vm299, %v673
      %690 = vst.msk [vmem:[%s226 + $0x50] sm:$0xff] %vm299, %v674
      %691 = vst.msk [vmem:[%s226 + $0x58] sm:$0xff] %vm299, %v675
      %692 = vst.msk [vmem:[%s226 + $0x60] sm:$0xff] %vm299, %v676
      %693 = vst.msk [vmem:[%s226 + $0x68] sm:$0xff] %vm299, %v677
      %694 = vst.msk [vmem:[%s226 + $0x70] sm:$0xff] %vm299, %v678
      %695 = vst.msk [vmem:[%s226 + $0x78] sm:$0xff] %vm299, %v679
      %s696 = smul.u32 16, %s16
      %p697 = scmp.lt.s32.totalorder %s696, 63
      %s698 = scalar_select %p697, %s696, 63
      %s699 = smul.addr %s698, 8
      %s700 = scalar_lea.vmem %s5, %s699
      // Predicated region
      $region41: #{tpu_custom_call.1} parent=39 // pred_check
        %p701 = pneg %p144
      $region42: #{tpu_custom_call.1} parent=39 // pred_check_branch
        %703 = sbr.rel (%p701) target = $region44
      $region43: #{tpu_custom_call.1} parent=39 // pred_region
        %s704 = smul.u32 16, %s16
      $region44: #{tpu_custom_call.1} parent=39 // pred_fallthru
        _
    $region40: #{tpu_custom_call.1} parent=5 // pred_fallthru
      _
    %p705 = scmp.le.s32.totalorder 2, %s11
    // Predicated region
    $region45: #{tpu_custom_call.1} parent=5 // pred_check
      %p706 = pneg %p705
    $region46: #{tpu_custom_call.1} parent=5 // pred_check_branch
      %708 = sbr.rel (%p706) target = $region48
    $region47: #{tpu_custom_call.1} parent=5 // pred_region
      %s709 = ssub.s32 %s11, 2
      // Predicated region
      $region49: #{tpu_custom_call.1} parent=47 // pred_check
        %p710 = pneg %p150
      $region50: #{tpu_custom_call.1} parent=47 // pred_check_branch
        %712 = sbr.rel (%p710) target = $region52
      $region51: #{tpu_custom_call.1} parent=47 // pred_region
        %s713 = smul.u32 16, %s17
        %p714 = scmp.lt.s32.totalorder %s713, 63
        %s715 = scalar_select %p714, %s713, 63
        %s716 = smul.addr %s715, 8
        %s717 = scalar_lea.vmem %s5, %s716
      $region52: #{tpu_custom_call.1} parent=47 // pred_fallthru
        _
    $region48: #{tpu_custom_call.1} parent=5 // pred_fallthru
      _
  $region6: #{tpu_custom_call.1} parent=0 // loop_footer
    %s15 = sadd.s32 1, %s11
  $region7: #{tpu_custom_call.1} parent=0 // loop_footer_branch
    %10 = sbr.rel target = $region3
  $region8: #{tpu_custom_call.1} parent=0 // loop_exit
    _

</llo_original>
